<compile_context>
chip_gen: v7x
topology: tpu7x:2x2x1
jax: 0.10.0
libtpu: 0.0.40
codegen_flags: <defaults>
</compile_context>

<pallas_src>
import functools
import math

import jax
import jax.numpy as jnp
from jax.experimental import pallas as pl
from jax.experimental.pallas import tpu as pltpu

_MIB = 1024 * 1024

# Generation-specific tiling configuration (per performance review).
#   tm: row tile, tI: target intermediate tile, h_align: pad H to this
#   multiple (256x256 MXU parts), vmem: scoped VMEM limit, row_shards:
#   TensorCores sharing the "parallel" row axis.
_CONFIGS = {
    "v5e":   dict(tm=256,  tI=1024, h_align=128, vmem=100 * _MIB, row_shards=1),
    "v6e":   dict(tm=1024, tI=1024, h_align=256, vmem=100 * _MIB, row_shards=1),
    "v7x":   dict(tm=256,  tI=512,  h_align=256, vmem=50 * _MIB,  row_shards=2),
    "other": dict(tm=256,  tI=512,  h_align=128, vmem=None,       row_shards=1),
}


def _tpu_generation():
    try:
        kind = jax.devices()[0].device_kind.lower()
    except Exception:
        return "other"
    if "v5p" in kind:
        return "other"          # conservative defaults for the trainer part
    if "v5" in kind:
        return "v5e"
    if "v6" in kind:
        return "v6e"
    if "7" in kind:
        return "v7x"
    return "other"


def _round_up(n, m):
    return ((n + m - 1) // m) * m


def _gelu_exact(x):
    # Matches torch.nn.GELU() default (erf-based, not tanh approximation).
    return 0.5 * x * (1.0 + jax.lax.erf(x * (1.0 / math.sqrt(2.0))))


# ----------------------------------------------------------------------------
# kernel
# ----------------------------------------------------------------------------
def mlp_kernel(x_ref, w1_ref, b1_ref, w2_ref, b2_ref, o_ref, *scratch):
    # x_ref : (tm, H_pad)   compute dtype, resident across j
    # w1_ref: (H_pad, tI)   compute dtype (W1 column tile)
    # b1_ref: (1, tI)       f32
    # w2_ref: (tI, H_pad)   compute dtype (W2 row tile)
    # b2_ref: (1, H_pad)    f32
    # o_ref : (tm, H_pad)   output tile, resident across j
    # scratch: optional (tm, H_pad) f32 accumulator.  Absent when the output
    #          dtype is f32, in which case we accumulate directly into o_ref.
    acc_ref = scratch[0] if scratch else o_ref
    j = pl.program_id(1)

    @pl.when(j == 0)
    def _init():
        acc_ref[...] = jnp.zeros_like(acc_ref)

    # First matmul + bias + exact GELU for this I-tile (f32 math after MXU).
    h = jnp.dot(x_ref[...], w1_ref[...], preferred_element_type=jnp.float32)
    h = _gelu_exact(h + b1_ref[...])

    # Second matmul: accumulate this I-tile's contribution in f32.
    acc_ref[...] += jnp.dot(
        h.astype(w2_ref.dtype), w2_ref[...], preferred_element_type=jnp.float32
    )

    @pl.when(j == pl.num_programs(1) - 1)
    def _finalize():
        o_ref[...] = (acc_ref[...] + b2_ref[...]).astype(o_ref.dtype)


# ----------------------------------------------------------------------------
# wrapper
# ----------------------------------------------------------------------------
def prepare_mlp_params(w1, b1, w2, b2, *, compute_dtype=jnp.bfloat16, config=None):
    """One-time pad + cast of the weights (hoisted out of the forward path).

    Cache the returned dict and reuse it across forward calls so the per-call
    HBM rewrite of both weight matrices disappears from the hot path.
    """
    if config is None:
        config = _CONFIGS[_tpu_generation()]
    H, I = w1.shape

    H_pad = _round_up(max(H, 1), config["h_align"])
    H_pad = max(H_pad, 128)

    # Split round_up(I,128) into equal lane-aligned chunks no larger than the
    # target tI: never worse than a fixed tI, often less dead padding.
    I128 = _round_up(max(I, 1), 128)
    tI_target = max(128, config["tI"])
    n_j = max(1, -(-I128 // tI_target))
    tI = _round_up(-(-I128 // n_j), 128)
    I_pad = n_j * tI

    def pad_to(a, shape):
        if tuple(a.shape) == tuple(shape):
            return a
        return jnp.pad(a, [(0, t - s) for s, t in zip(a.shape, shape)])

    w1p = pad_to(w1, (H_pad, I_pad)).astype(compute_dtype)
    w2p = pad_to(w2, (I_pad, H_pad)).astype(compute_dtype)
    b1p = pad_to(b1.reshape(1, I), (1, I_pad)).astype(jnp.float32)
    b2p = pad_to(b2.reshape(1, H), (1, H_pad)).astype(jnp.float32)

    return dict(
        w1=w1p, b1=b1p, w2=w2p, b2=b2p,
        H=int(H), I=int(I), tI=int(tI),
        compute_dtype=compute_dtype, config=config,
    )


@functools.partial(
    jax.jit,
    static_argnames=("tm", "tI", "M_pad", "compute_dtype", "vmem_limit_bytes"),
)
def _mlp_forward_impl(x2, w1p, b1p, w2p, b2p, *, tm, tI, M_pad,
                      compute_dtype, vmem_limit_bytes):
    M, H = x2.shape
    H_pad, I_pad = w1p.shape

    xp = x2
    if (M_pad, H_pad) != (M, H):
        xp = jnp.pad(x2, ((0, M_pad - M), (0, H_pad - H)))
    xp = xp.astype(compute_dtype)

    out_dtype = x2.dtype
    # f32 output -> accumulate directly into o_ref (saves tm*H_pad*4 B VMEM);
    # otherwise keep a dedicated f32 accumulator and cast at finalize.
    use_scratch = out_dtype != jnp.float32
    scratch_shapes = [pltpu.VMEM((tm, H_pad), jnp.float32)] if use_scratch else []

    grid = (M_pad // tm, I_pad // tI)

    cp_kwargs = dict(dimension_semantics=("parallel", "arbitrary"))
    if vmem_limit_bytes is not None:
        cp_kwargs["vmem_limit_bytes"] = vmem_limit_bytes

    out_pad = pl.pallas_call(
        mlp_kernel,
        out_shape=jax.ShapeDtypeStruct((M_pad, H_pad), out_dtype),
        grid_spec=pltpu.PrefetchScalarGridSpec(
            num_scalar_prefetch=0,
            grid=grid,
            in_specs=[
                pl.BlockSpec((tm, H_pad), lambda i, j: (i, 0)),   # x rows (resident over j)
                pl.BlockSpec((H_pad, tI), lambda i, j: (0, j)),   # W1 column tile
                pl.BlockSpec((1, tI), lambda i, j: (0, j)),       # b1 tile
                pl.BlockSpec((tI, H_pad), lambda i, j: (j, 0)),   # W2 row tile
                pl.BlockSpec((1, H_pad), lambda i, j: (0, 0)),    # b2
            ],
            out_specs=pl.BlockSpec((tm, H_pad), lambda i, j: (i, 0)),
            scratch_shapes=scratch_shapes,
        ),
        compiler_params=pltpu.CompilerParams(**cp_kwargs),
    )(xp, w1p, b1p, w2p, b2p)

    return out_pad[:M, :H]


def mlp_forward(x, params):
    """x: [..., H] -> [..., H] using pre-prepared (padded, cast) parameters."""
    cfg = params["config"]
    H = params["H"]
    lead = x.shape[:-1]
    assert x.shape[-1] == H
    M = 1
    for d in lead:
        M *= int(d)

    # Row tile: honor the generation default, shrink for small M, and ensure
    # >=2 row tiles where multiple TensorCores shard the 'parallel' axis (v7x).
    M128 = _round_up(max(M, 1), 128)
    tm_cap = max(128, (M128 // max(1, cfg["row_shards"])) // 128 * 128)
    tm = max(128, min(cfg["tm"], tm_cap))
    M_pad = _round_up(M, tm)

    out2 = _mlp_forward_impl(
        x.reshape(M, H),
        params["w1"], params["b1"], params["w2"], params["b2"],
        tm=tm, tI=params["tI"], M_pad=M_pad,
        compute_dtype=params["compute_dtype"],
        vmem_limit_bytes=cfg["vmem"],
    )
    return out2.reshape(*lead, H)


# ----------------------------------------------------------------------------
# references
# ----------------------------------------------------------------------------
def reference_mlp(x, w1, b1, w2, b2, compute_dtype=jnp.bfloat16):
    """Pure-JAX reference at matching precision (bf16 operands, f32 accum)."""
    xc = x.astype(compute_dtype)
    h = jnp.dot(xc, w1.astype(compute_dtype), preferred_element_type=jnp.float32)
    h = _gelu_exact(h + b1.astype(jnp.float32))
    o = jnp.dot(
        h.astype(compute_dtype), w2.astype(compute_dtype),
        preferred_element_type=jnp.float32,
    ) + b2.astype(jnp.float32)
    return o.astype(x.dtype)


def reference_mlp_f32(x, w1, b1, w2, b2):
    h = x @ w1 + b1
    h = _gelu_exact(h)
    return h @ w2 + b2


if __name__ == "__main__":
    # Small shapes implied by the module: hidden=32, intermediate=64,
    # batch=2, seq=8.
    B, S, H, I = 2, 8, 32, 64
    key = jax.random.PRNGKey(0)
    kx, k1, k2, k3, k4 = jax.random.split(key, 5)

    x = jax.random.normal(kx, (B, S, H), dtype=jnp.float32)
    # Deterministic parameter init (uniform, torch-Linear-like scale).
    lim1 = 1.0 / math.sqrt(H)
    lim2 = 1.0 / math.sqrt(I)
    w1 = jax.random.uniform(k1, (H, I), jnp.float32, -lim1, lim1)
    b1 = jax.random.uniform(k2, (I,), jnp.float32, -lim1, lim1)
    w2 = jax.random.uniform(k3, (I, H), jnp.float32, -lim2, lim2)
    b2 = jax.random.uniform(k4, (H,), jnp.float32, -lim2, lim2)

    # One-time weight preparation (pad + bf16 cast), then the kernel call.
    params = prepare_mlp_params(w1, b1, w2, b2)
    out = mlp_forward(x, params)
    out = jax.block_until_ready(out)
    assert out.shape == (B, S, H)

    # Check against a reference computed at matching (bf16-operand) precision.
    ref = reference_mlp(x, w1, b1, w2, b2)
    assert jnp.allclose(out, ref, atol=2e-3, rtol=2e-3), "mismatch vs bf16 reference"

    # Loose sanity check against full-f32 math (bf16 operand rounding only).
    # TODO(synk): offer compute_dtype=jnp.float32 path for strict f32 parity.
    ref32 = reference_mlp_f32(x, w1, b1, w2, b2)
    assert jnp.allclose(out, ref32, atol=5e-2, rtol=5e-2), "mismatch vs f32 reference"

    print("KERNEL_OK")
</pallas_src>

<mosaic_0001>
module attributes {stable_mosaic.version = 11 : i64} {
  func.func @mlp_kernel(%arg0: i32, %arg1: i32, %arg2: memref<128x128xbf16, #tpu.memory_space<vmem>>, %arg3: memref<128x128xbf16, #tpu.memory_space<vmem>>, %arg4: memref<1x128xf32, #tpu.memory_space<vmem>>, %arg5: memref<128x128xbf16, #tpu.memory_space<vmem>>, %arg6: memref<1x128xf32, #tpu.memory_space<vmem>>, %arg7: memref<128x128xf32, #tpu.memory_space<vmem>>) attributes {dimension_semantics = [#tpu.dimension_semantics<parallel>, #tpu.dimension_semantics<arbitrary>], iteration_bounds = array<i64: 1, 1>, scalar_prefetch = 0 : i64, scratch_operands = 0 : i64, tpu.core_type = #tpu.core_type<tc>, window_params = [{transform_indices = @transform_0, window_bounds = array<i64: 128, 128>}, {transform_indices = @transform_1, window_bounds = array<i64: 128, 128>}, {transform_indices = @transform_2, window_bounds = array<i64: 1, 128>}, {transform_indices = @transform_3, window_bounds = array<i64: 128, 128>}, {pipeline_mode = #tpu.pipeline_mode<synchronous>, transform_indices = @transform_4, window_bounds = array<i64: 1, 128>}, {transform_indices = @transform_5, window_bounds = array<i64: 128, 128>}]} {
    %c0_i32 = arith.constant 0 : i32
    %0 = arith.cmpi eq, %arg1, %c0_i32 : i32
    %1 = arith.extui %0 : i1 to i32
    %c0_i32_0 = arith.constant 0 : i32
    %2 = arith.cmpi ne, %1, %c0_i32_0 : i32
    scf.if %2 {
      %cst_18 = arith.constant 0.000000e+00 : f32
      %26 = vector.broadcast %cst_18 : f32 to vector<128x128xf32>
      %c0_19 = arith.constant 0 : index
      %c0_20 = arith.constant 0 : index
      %27 = vector.load %arg7[%c0_19, %c0_20] : memref<128x128xf32, #tpu.memory_space<vmem>>, vector<128x128xf32>
      tpu.vector_store %arg7[%c0_19, %c0_20], %26 {strides = array<i32>} : memref<128x128xf32, #tpu.memory_space<vmem>>, vector<128x128xf32>,
    } else {
    }
    %c0 = arith.constant 0 : index
    %c0_1 = arith.constant 0 : index
    %3 = vector.load %arg2[%c0, %c0_1] : memref<128x128xbf16, #tpu.memory_space<vmem>>, vector<128x128xbf16>
    %c0_2 = arith.constant 0 : index
    %c0_3 = arith.constant 0 : index
    %4 = vector.load %arg3[%c0_2, %c0_3] : memref<128x128xbf16, #tpu.memory_space<vmem>>, vector<128x128xbf16>
    %cst = arith.constant dense<0.000000e+00> : vector<128x128xf32>
    %5 = tpu.matmul %3, %4, %cst {dimension_numbers = #tpu.dot_dimension_numbers<[1], [0], [0], [1], [0, 0, 1, 1], [], []>} : vector<128x128xbf16>, vector<128x128xbf16>, vector<128x128xf32> -> vector<128x128xf32>
    %c0_4 = arith.constant 0 : index
    %c0_5 = arith.constant 0 : index
    %6 = vector.load %arg4[%c0_4, %c0_5] : memref<1x128xf32, #tpu.memory_space<vmem>>, vector<1x128xf32>
    %7 = vector.broadcast %6 : vector<1x128xf32> to vector<128x128xf32>
    %8 = arith.addf %5, %7 : vector<128x128xf32>
    %cst_6 = arith.constant 5.000000e-01 : f32
    %9 = vector.broadcast %cst_6 : f32 to vector<128x128xf32>
    %10 = arith.mulf %9, %8 : vector<128x128xf32>
    %cst_7 = arith.constant 0.707106769 : f32
    %11 = vector.broadcast %cst_7 : f32 to vector<128x128xf32>
    %12 = arith.mulf %8, %11 : vector<128x128xf32>
    %13 = math.erf %12 : vector<128x128xf32>
    %cst_8 = arith.constant 1.000000e+00 : f32
    %14 = vector.broadcast %cst_8 : f32 to vector<128x128xf32>
    %15 = arith.addf %14, %13 : vector<128x128xf32>
    %16 = arith.mulf %10, %15 : vector<128x128xf32>
    %c0_9 = arith.constant 0 : index
    %c0_10 = arith.constant 0 : index
    %17 = vector.load %arg7[%c0_9, %c0_10] : memref<128x128xf32, #tpu.memory_space<vmem>>, vector<128x128xf32>
    %18 = arith.truncf %16 : vector<128x128xf32> to vector<128x128xbf16>
    %c0_11 = arith.constant 0 : index
    %c0_12 = arith.constant 0 : index
    %19 = vector.load %arg5[%c0_11, %c0_12] : memref<128x128xbf16, #tpu.memory_space<vmem>>, vector<128x128xbf16>
    %cst_13 = arith.constant dense<0.000000e+00> : vector<128x128xf32>
    %20 = tpu.matmul %18, %19, %cst_13 {dimension_numbers = #tpu.dot_dimension_numbers<[1], [0], [0], [1], [0, 0, 1, 1], [], []>} : vector<128x128xbf16>, vector<128x128xbf16>, vector<128x128xf32> -> vector<128x128xf32>
    %21 = arith.addf %17, %20 : vector<128x128xf32>
    %c0_14 = arith.constant 0 : index
    %c0_15 = arith.constant 0 : index
    %22 = vector.load %arg7[%c0_14, %c0_15] : memref<128x128xf32, #tpu.memory_space<vmem>>, vector<128x128xf32>
    tpu.vector_store %arg7[%c0_14, %c0_15], %21 {strides = array<i32>} : memref<128x128xf32, #tpu.memory_space<vmem>>, vector<128x128xf32>,
    %c0_i32_16 = arith.constant 0 : i32
    %23 = arith.cmpi eq, %arg1, %c0_i32_16 : i32
    %24 = arith.extui %23 : i1 to i32
    %c0_i32_17 = arith.constant 0 : i32
    %25 = arith.cmpi ne, %24, %c0_i32_17 : i32
    scf.if %25 {
      %c0_18 = arith.constant 0 : index
      %c0_19 = arith.constant 0 : index
      %26 = vector.load %arg7[%c0_18, %c0_19] : memref<128x128xf32, #tpu.memory_space<vmem>>, vector<128x128xf32>
      %c0_20 = arith.constant 0 : index
      %c0_21 = arith.constant 0 : index
      %27 = vector.load %arg6[%c0_20, %c0_21] : memref<1x128xf32, #tpu.memory_space<vmem>>, vector<1x128xf32>
      %28 = vector.broadcast %27 : vector<1x128xf32> to vector<128x128xf32>
      %29 = arith.addf %26, %28 : vector<128x128xf32>
      %c0_22 = arith.constant 0 : index
      %c0_23 = arith.constant 0 : index
      %30 = vector.load %arg7[%c0_22, %c0_23] : memref<128x128xf32, #tpu.memory_space<vmem>>, vector<128x128xf32>
      tpu.vector_store %arg7[%c0_22, %c0_23], %29 {strides = array<i32>} : memref<128x128xf32, #tpu.memory_space<vmem>>, vector<128x128xf32>,
    } else {
    }
    return
  }
  func.func @transform_0(%arg0: i32, %arg1: i32) -> (i32, i32) {
    %c0_i32 = arith.constant 0 : i32
    %c0_i32_0 = arith.constant 0 : i32
    return %arg0, %c0_i32 : i32, i32
  }
  func.func @transform_1(%arg0: i32, %arg1: i32) -> (i32, i32) {
    %c0_i32 = arith.constant 0 : i32
    %c0_i32_0 = arith.constant 0 : i32
    return %c0_i32, %arg1 : i32, i32
  }
  func.func @transform_2(%arg0: i32, %arg1: i32) -> (i32, i32) {
    %c0_i32 = arith.constant 0 : i32
    %c0_i32_0 = arith.constant 0 : i32
    return %c0_i32, %arg1 : i32, i32
  }
  func.func @transform_3(%arg0: i32, %arg1: i32) -> (i32, i32) {
    %c0_i32 = arith.constant 0 : i32
    %c0_i32_0 = arith.constant 0 : i32
    return %arg1, %c0_i32 : i32, i32
  }
  func.func @transform_4(%arg0: i32, %arg1: i32) -> (i32, i32) {
    %c0_i32 = arith.constant 0 : i32
    %c0_i32_0 = arith.constant 0 : i32
    %c0_i32_1 = arith.constant 0 : i32
    return %c0_i32, %c0_i32_0 : i32, i32
  }
  func.func @transform_5(%arg0: i32, %arg1: i32) -> (i32, i32) {
    %c0_i32 = arith.constant 0 : i32
    %c0_i32_0 = arith.constant 0 : i32
    return %arg0, %c0_i32 : i32, i32
  }
}

</mosaic_0001>

<llo_original>
// kernel: _mlp_forward_impl.1
$region0: #{_mlp_forward_impl.1}
  #allocation0 [shape = 'u32[]', space=smem, size = 0x4, offset = 0x4, fixed_abs, tag = 'smem constant byte address 0x4 - core index']
  #allocation1 [shape = 'u32[144,128]{1,0:T(1,128)}', space=vmem, size = 0x12000, scoped, tag = 'internal scratch']
  %s0 = inlined_call_operand.vmem [shape: bf16[128,128], index: 0, kind: input, shape index: {}]
  %s1 = inlined_call_operand.vmem [shape: bf16[128,128], index: 1, kind: input, shape index: {}]
  %s2 = inlined_call_operand.vmem [shape: f32[1,128], index: 2, kind: input, shape index: {}]
  %s3 = inlined_call_operand.hbm [shape: bf16[128,128], index: 3, kind: input, shape index: {}]
  %s4 = inlined_call_operand.vmem [shape: f32[1,128], index: 4, kind: input, shape index: {}]
  %s5 = inlined_call_operand.vmem [shape: f32[128,128], index: 5, kind: output, shape index: {}]
  %s6 = sld [smem:[#allocation0]]
  $region42: #{_mlp_forward_impl.1} parent=0
    _
  %s8 = ssub.s32 1, %s6
  %s9 = scalar_select 0, %s8, %s6
  $region1: #{_mlp_forward_impl.1} parent=0
    #allocation2 [shape = 'u8[32768]{0}', space=vmem, size = 0x8000, scoped, tag = 'input window, operand 3, single buffered']
    #allocation3 [shape = 's32[1]{0}', space=sflag, size = 0x4, scoped, tag = 'scoped memory for _mlp_forward_impl.1']
    %10 = vsyncpa [#allocation3], 0
    // Predicated region
    $region2: #{_mlp_forward_impl.1} parent=1 // pred_check
      _
    $region3: #{_mlp_forward_impl.1} parent=1 // pred_check_branch
      %12 = sbr.rel (0) target = $region5
    $region4: #{_mlp_forward_impl.1} parent=1 // pred_region
      _
    $region5: #{_mlp_forward_impl.1} parent=1 // pred_fallthru
      _
    // Predicated region
    $region6: #{_mlp_forward_impl.1} parent=1 // pred_check
      _
    $region7: #{_mlp_forward_impl.1} parent=1 // pred_check_branch
      %14 = sbr.rel (0) target = $region9
    $region8: #{_mlp_forward_impl.1} parent=1 // pred_region
      _
    $region9: #{_mlp_forward_impl.1} parent=1 // pred_fallthru
      _
    // Predicated region
    $region10: #{_mlp_forward_impl.1} parent=1 // pred_check
      _
    $region11: #{_mlp_forward_impl.1} parent=1 // pred_check_branch
      %16 = sbr.rel (0) target = $region13
    $region12: #{_mlp_forward_impl.1} parent=1 // pred_region
      _
    $region13: #{_mlp_forward_impl.1} parent=1 // pred_fallthru
      _
    // Predicated region
    $region14: #{_mlp_forward_impl.1} parent=1 // pred_check
      _
    $region15: #{_mlp_forward_impl.1} parent=1 // pred_check_branch
      %18 = sbr.rel (0) target = $region17
    $region16: #{_mlp_forward_impl.1} parent=1 // pred_region
      %s20 = ssub.s32 1024, 1024
      %21 = vsyncadd [#allocation3], %s20
      %s22 = sshll.u32 [#allocation2], 4
      %s23 = int_to_ptr.vmem [resolvable:$true] %s22
      %28 = dma.hbm_to_vmem [thread:$0]  %s3, 1024, %s23, [#allocation3], 64, 64, 4
    $region17: #{_mlp_forward_impl.1} parent=1 // pred_fallthru
      _
    // Predicated region
    $region18: #{_mlp_forward_impl.1} parent=1 // pred_check
      _
    $region19: #{_mlp_forward_impl.1} parent=1 // pred_check_branch
      %30 = sbr.rel (0) target = $region21
    $region20: #{_mlp_forward_impl.1} parent=1 // pred_region
      _
    $region21: #{_mlp_forward_impl.1} parent=1 // pred_fallthru
      _
    // Predicated region
    $region22: #{_mlp_forward_impl.1} parent=1 // pred_check
      _
    $region23: #{_mlp_forward_impl.1} parent=1 // pred_check_branch
      %32 = sbr.rel (0) target = $region25
    $region24: #{_mlp_forward_impl.1} parent=1 // pred_region
      %33 = dma.done [#allocation3], 1024
    $region25: #{_mlp_forward_impl.1} parent=1 // pred_fallthru
      _
    %p35 = scmp.eq.s32.totalorder 0, 0
    // Predicated region
    $region26: #{_mlp_forward_impl.1} parent=1 // pred_check
      %p36 = pneg %p35
    $region27: #{_mlp_forward_impl.1} parent=1 // pred_check_branch
      %38 = sbr.rel (%p36) target = $region29
    $region28: #{_mlp_forward_impl.1} parent=1 // pred_region
      %39 = vst [vmem:[%s5] sm:$0xff] 0.0
      %40 = vst [vmem:[%s5 + $0x8] sm:$0xff] 0.0
      %41 = vst [vmem:[%s5 + $0x10] sm:$0xff] 0.0
      %42 = vst [vmem:[%s5 + $0x18] sm:$0xff] 0.0
      %43 = vst [vmem:[%s5 + $0x20] sm:$0xff] 0.0
      %44 = vst [vmem:[%s5 + $0x28] sm:$0xff] 0.0
      %45 = vst [vmem:[%s5 + $0x30] sm:$0xff] 0.0
      %46 = vst [vmem:[%s5 + $0x38] sm:$0xff] 0.0
      %47 = vst [vmem:[%s5 + $0x40] sm:$0xff] 0.0
      %48 = vst [vmem:[%s5 + $0x48] sm:$0xff] 0.0
      %49 = vst [vmem:[%s5 + $0x50] sm:$0xff] 0.0
      %50 = vst [vmem:[%s5 + $0x58] sm:$0xff] 0.0
      %51 = vst [vmem:[%s5 + $0x60] sm:$0xff] 0.0
      %52 = vst [vmem:[%s5 + $0x68] sm:$0xff] 0.0
      %53 = vst [vmem:[%s5 + $0x70] sm:$0xff] 0.0
      %54 = vst [vmem:[%s5 + $0x78] sm:$0xff] 0.0
    $region29: #{_mlp_forward_impl.1} parent=1 // pred_fallthru
      _
    %v55 = vld [vmem:[%s0] sm:$0xf]
    %v56 = vld [vmem:[%s0 + $0x4] sm:$0xf]
    %v57 = vld [vmem:[%s0 + $0x8] sm:$0xf]
    %v58 = vld [vmem:[%s0 + $0xc] sm:$0xf]
    %v59 = vld [vmem:[%s0 + $0x10] sm:$0xf]
    %v60 = vld [vmem:[%s0 + $0x14] sm:$0xf]
    %v61 = vld [vmem:[%s0 + $0x18] sm:$0xf]
    %v62 = vld [vmem:[%s0 + $0x1c] sm:$0xf]
    %v63 = vld [vmem:[%s0 + $0x20] sm:$0xf]
    %v64 = vld [vmem:[%s0 + $0x24] sm:$0xf]
    %v65 = vld [vmem:[%s0 + $0x28] sm:$0xf]
    %v66 = vld [vmem:[%s0 + $0x2c] sm:$0xf]
    %v67 = vld [vmem:[%s0 + $0x30] sm:$0xf]
    %v68 = vld [vmem:[%s0 + $0x34] sm:$0xf]
    %v69 = vld [vmem:[%s0 + $0x38] sm:$0xf]
    %v70 = vld [vmem:[%s0 + $0x3c] sm:$0xf]
    %v71 = vld [vmem:[%s1] sm:$0xf]
    %v72 = vld [vmem:[%s1 + $0x4] sm:$0xf]
    %v73 = vld [vmem:[%s1 + $0x8] sm:$0xf]
    %v74 = vld [vmem:[%s1 + $0xc] sm:$0xf]
    %v75 = vld [vmem:[%s1 + $0x10] sm:$0xf]
    %v76 = vld [vmem:[%s1 + $0x14] sm:$0xf]
    %v77 = vld [vmem:[%s1 + $0x18] sm:$0xf]
    %v78 = vld [vmem:[%s1 + $0x1c] sm:$0xf]
    %v79 = vld [vmem:[%s1 + $0x20] sm:$0xf]
    %v80 = vld [vmem:[%s1 + $0x24] sm:$0xf]
    %v81 = vld [vmem:[%s1 + $0x28] sm:$0xf]
    %v82 = vld [vmem:[%s1 + $0x2c] sm:$0xf]
    %v83 = vld [vmem:[%s1 + $0x30] sm:$0xf]
    %v84 = vld [vmem:[%s1 + $0x34] sm:$0xf]
    %v85 = vld [vmem:[%s1 + $0x38] sm:$0xf]
    %v86 = vld [vmem:[%s1 + $0x3c] sm:$0xf]
    %v87 = vld [vmem:[%s2] sm:$0x1]
    %v89 = vlaneseq
    %v90 = vshrl.u32 %v89, 7
    %v91 = vsub.s32 0, %v90
    %v92 = vrot.slane %v87, %v91
    %v110 = vunpack.c.l.b16 %v55
    %v111 = vunpack.c.l.b16 %v56
    %v112 = vunpack.c.l.b16 %v57
    %v113 = vunpack.c.l.b16 %v58
    %v114 = vunpack.c.l.b16 %v59
    %v115 = vunpack.c.l.b16 %v60
    %v116 = vunpack.c.l.b16 %v61
    %v117 = vunpack.c.l.b16 %v62
    %v118 = vunpack.c.l.b16 %v63
    %v119 = vunpack.c.l.b16 %v64
    %v120 = vunpack.c.l.b16 %v65
    %v121 = vunpack.c.l.b16 %v66
    %v122 = vunpack.c.l.b16 %v67
    %v123 = vunpack.c.l.b16 %v68
    %v124 = vunpack.c.l.b16 %v69
    %v125 = vunpack.c.l.b16 %v70
    %v126 = vpack.c.b16 %v111, %v110
    %v127 = vpack.c.b16 %v113, %v112
    %v128 = vpack.c.b16 %v115, %v114
    %v129 = vpack.c.b16 %v117, %v116
    %v130 = vpack.c.b16 %v119, %v118
    %v131 = vpack.c.b16 %v121, %v120
    %v132 = vpack.c.b16 %v123, %v122
    %v133 = vpack.c.b16 %v125, %v124
    %v158 = vunpack.c.l.b16 %v71
    %v159 = vunpack.c.l.b16 %v72
    %v160 = vunpack.c.l.b16 %v73
    %v161 = vunpack.c.l.b16 %v74
    %v162 = vunpack.c.l.b16 %v75
    %v163 = vunpack.c.l.b16 %v76
    %v164 = vunpack.c.l.b16 %v77
    %v165 = vunpack.c.l.b16 %v78
    %v166 = vunpack.c.l.b16 %v79
    %v167 = vunpack.c.l.b16 %v80
    %v168 = vunpack.c.l.b16 %v81
    %v169 = vunpack.c.l.b16 %v82
    %v170 = vunpack.c.l.b16 %v83
    %v171 = vunpack.c.l.b16 %v84
    %v172 = vunpack.c.l.b16 %v85
    %v173 = vunpack.c.l.b16 %v86
    %v174 = vpack.c.b16 %v159, %v158
    %v175 = vpack.c.b16 %v161, %v160
    %v176 = vpack.c.b16 %v163, %v162
    %v177 = vpack.c.b16 %v165, %v164
    %v178 = vpack.c.b16 %v167, %v166
    %v179 = vpack.c.b16 %v169, %v168
    %v180 = vpack.c.b16 %v171, %v170
    %v181 = vpack.c.b16 %v173, %v172
    %190 = vmatprep.subr.bf16.mxu0 0
    %191 = vmatpush1.bf16.msra.mxu0 %v174
    %192 = vmatprep.subr.bf16.mxu0 0
    %193 = vmatpush1.bf16.msra.mxu0 %v175
    %194 = vmatprep.subr.bf16.mxu0 0
    %195 = vmatpush1.bf16.msra.mxu0 %v176
    %196 = vmatprep.subr.bf16.mxu0 0
    %197 = vmatpush1.bf16.msra.mxu0 %v177
    %198 = vmatprep.subr.bf16.mxu0 0
    %199 = vmatpush1.bf16.msra.mxu0 %v178
    %200 = vmatprep.subr.bf16.mxu0 0
    %201 = vmatpush1.bf16.msra.mxu0 %v179
    %202 = vmatprep.subr.bf16.mxu0 0
    %203 = vmatpush1.bf16.msra.mxu0 %v180
    %204 = vmatprep.subr.bf16.mxu0 0
    %205 = vmatpush1.bf16.msra.mxu0 %v181
    %206 = vmatprep.subr.bf16.mxu0 0
    %207 = vmatpush1.bf16.msra.mxu0 0
    %208 = vmatprep.subr.bf16.mxu0 0
    %209 = vmatpush1.bf16.msra.mxu0 0
    %210 = vmatprep.subr.bf16.mxu0 0
    %211 = vmatpush1.bf16.msra.mxu0 0
    %212 = vmatprep.subr.bf16.mxu0 0
    %213 = vmatpush1.bf16.msra.mxu0 0
    %214 = vmatprep.subr.bf16.mxu0 0
    %215 = vmatpush1.bf16.msra.mxu0 0
    %216 = vmatprep.subr.bf16.mxu0 0
    %217 = vmatpush1.bf16.msra.mxu0 0
    %218 = vmatprep.subr.bf16.mxu0 0
    %219 = vmatpush1.bf16.msra.mxu0 0
    %220 = vmatprep.subr.bf16.mxu0 0
    %221 = vmatpush1.bf16.msra.mxu0 0
    %222 = vmatprep.mubr.bf16.mxu0 0
    %223 = vmatmul.mubr.bf16.gmra.mrb[0].mxu0 %v126
    %v224 = vpop.f32.mrb[0].mxu0
    %v225 = vadd.f32 %v92, %v224
    %v226 = vpop.f32.mrb[0].mxu0
    %v227 = vpop.f32.mrb[0].mxu0
    %v228 = vadd.f32 %v92, %v227
    %v229 = vpop.f32.mrb[0].mxu0
    %230 = vmatprep.mubr.bf16.mxu0 0
    %231 = vmatmul.mubr.bf16.gmra.mrb[0].mxu0 %v127
    %v232 = vpop.f32.mrb[0].mxu0
    %v233 = vadd.f32 %v92, %v232
    %v234 = vpop.f32.mrb[0].mxu0
    %v235 = vpop.f32.mrb[0].mxu0
    %v236 = vadd.f32 %v92, %v235
    %v237 = vpop.f32.mrb[0].mxu0
    %238 = vmatprep.mubr.bf16.mxu0 0
    %239 = vmatmul.mubr.bf16.gmra.mrb[0].mxu0 %v128
    %v240 = vpop.f32.mrb[0].mxu0
    %v241 = vadd.f32 %v92, %v240
    %v242 = vpop.f32.mrb[0].mxu0
    %v243 = vpop.f32.mrb[0].mxu0
    %v244 = vadd.f32 %v92, %v243
    %v245 = vpop.f32.mrb[0].mxu0
    %246 = vmatprep.mubr.bf16.mxu0 0
    %247 = vmatmul.mubr.bf16.gmra.mrb[0].mxu0 %v129
    %v248 = vpop.f32.mrb[0].mxu0
    %v249 = vadd.f32 %v92, %v248
    %v250 = vpop.f32.mrb[0].mxu0
    %v251 = vpop.f32.mrb[0].mxu0
    %v252 = vadd.f32 %v92, %v251
    %v253 = vpop.f32.mrb[0].mxu0
    %254 = vmatprep.mubr.bf16.mxu0 0
    %255 = vmatmul.mubr.bf16.gmra.mrb[0].mxu0 %v130
    %v256 = vpop.f32.mrb[0].mxu0
    %v257 = vadd.f32 %v92, %v256
    %v258 = vpop.f32.mrb[0].mxu0
    %v259 = vpop.f32.mrb[0].mxu0
    %v260 = vadd.f32 %v92, %v259
    %v261 = vpop.f32.mrb[0].mxu0
    %262 = vmatprep.mubr.bf16.mxu0 0
    %263 = vmatmul.mubr.bf16.gmra.mrb[0].mxu0 %v131
    %v264 = vpop.f32.mrb[0].mxu0
    %v265 = vadd.f32 %v92, %v264
    %v266 = vpop.f32.mrb[0].mxu0
    %v267 = vpop.f32.mrb[0].mxu0
    %v268 = vadd.f32 %v92, %v267
    %v269 = vpop.f32.mrb[0].mxu0
    %270 = vmatprep.mubr.bf16.mxu0 0
    %271 = vmatmul.mubr.bf16.gmra.mrb[0].mxu0 %v132
    %v272 = vpop.f32.mrb[0].mxu0
    %v273 = vadd.f32 %v92, %v272
    %v274 = vpop.f32.mrb[0].mxu0
    %v275 = vpop.f32.mrb[0].mxu0
    %v276 = vadd.f32 %v92, %v275
    %v277 = vpop.f32.mrb[0].mxu0
    %278 = vmatprep.mubr.bf16.mxu0 0
    %279 = vmatmul.mubr.bf16.gmra.mrb[0].mxu0 %v133
    %v280 = vpop.f32.mrb[0].mxu0
    %v281 = vadd.f32 %v92, %v280
    %v282 = vpop.f32.mrb[0].mxu0
    %v283 = vpop.f32.mrb[0].mxu0
    %v284 = vadd.f32 %v92, %v283
    %v285 = vpop.f32.mrb[0].mxu0
    %286 = vdwg.mxu0
    %v287 = vmul.f32 %v225, 0.5
    %v288 = vmul.f32 %v228, 0.5
    %v289 = vmul.f32 %v233, 0.5
    %v290 = vmul.f32 %v236, 0.5
    %v291 = vmul.f32 %v241, 0.5
    %v292 = vmul.f32 %v244, 0.5
    %v293 = vmul.f32 %v249, 0.5
    %v294 = vmul.f32 %v252, 0.5
    %v295 = vmul.f32 %v257, 0.5
    %v296 = vmul.f32 %v260, 0.5
    %v297 = vmul.f32 %v265, 0.5
    %v298 = vmul.f32 %v268, 0.5
    %v299 = vmul.f32 %v273, 0.5
    %v300 = vmul.f32 %v276, 0.5
    %v301 = vmul.f32 %v281, 0.5
    %v302 = vmul.f32 %v284, 0.5
    %v303 = vmul.f32 %v225, 0.70710677
    %v304 = vmul.f32 %v228, 0.70710677
    %v305 = vmul.f32 %v233, 0.70710677
    %v306 = vmul.f32 %v236, 0.70710677
    %v307 = vmul.f32 %v241, 0.70710677
    %v308 = vmul.f32 %v244, 0.70710677
    %v309 = vmul.f32 %v249, 0.70710677
    %v310 = vmul.f32 %v252, 0.70710677
    %v311 = vmul.f32 %v257, 0.70710677
    %v312 = vmul.f32 %v260, 0.70710677
    %v313 = vmul.f32 %v265, 0.70710677
    %v314 = vmul.f32 %v268, 0.70710677
    %v315 = vmul.f32 %v273, 0.70710677
    %v316 = vmul.f32 %v276, 0.70710677
    %v317 = vmul.f32 %v281, 0.70710677
    %v318 = vmul.f32 %v284, 0.70710677
    %v319 = verf.f32.pop %v303
    %v320 = verf.f32.pop %v304
    %v321 = verf.f32.pop %v305
    %v322 = verf.f32.pop %v306
    %v323 = verf.f32.pop %v307
    %v324 = verf.f32.pop %v308
    %v325 = verf.f32.pop %v309
    %v326 = verf.f32.pop %v310
    %v327 = verf.f32.pop %v311
    %v328 = verf.f32.pop %v312
    %v329 = verf.f32.pop %v313
    %v330 = verf.f32.pop %v314
    %v331 = verf.f32.pop %v315
    %v332 = verf.f32.pop %v316
    %v333 = verf.f32.pop %v317
    %v334 = verf.f32.pop %v318
    %v335 = vadd.f32 %v319, 1.0
    %v336 = vadd.f32 %v320, 1.0
    %v337 = vadd.f32 %v321, 1.0
    %v338 = vadd.f32 %v322, 1.0
    %v339 = vadd.f32 %v323, 1.0
    %v340 = vadd.f32 %v324, 1.0
    %v341 = vadd.f32 %v325, 1.0
    %v342 = vadd.f32 %v326, 1.0
    %v343 = vadd.f32 %v327, 1.0
    %v344 = vadd.f32 %v328, 1.0
    %v345 = vadd.f32 %v329, 1.0
    %v346 = vadd.f32 %v330, 1.0
    %v347 = vadd.f32 %v331, 1.0
    %v348 = vadd.f32 %v332, 1.0
    %v349 = vadd.f32 %v333, 1.0
    %v350 = vadd.f32 %v334, 1.0
    %v351 = vmul.f32 %v287, %v335
    %v352 = vmul.f32 %v288, %v336
    %v353 = vmul.f32 %v289, %v337
    %v354 = vmul.f32 %v290, %v338
    %v355 = vmul.f32 %v291, %v339
    %v356 = vmul.f32 %v292, %v340
    %v357 = vmul.f32 %v293, %v341
    %v358 = vmul.f32 %v294, %v342
    %v359 = vmul.f32 %v295, %v343
    %v360 = vmul.f32 %v296, %v344
    %v361 = vmul.f32 %v297, %v345
    %v362 = vmul.f32 %v298, %v346
    %v363 = vmul.f32 %v299, %v347
    %v364 = vmul.f32 %v300, %v348
    %v365 = vmul.f32 %v301, %v349
    %v366 = vmul.f32 %v302, %v350
    %v367 = vld [vmem:[%s5] sm:$0xff]
    %v368 = vld [vmem:[%s5 + $0x8] sm:$0xff]
    %v369 = vld [vmem:[%s5 + $0x10] sm:$0xff]
    %v370 = vld [vmem:[%s5 + $0x18] sm:$0xff]
    %v371 = vld [vmem:[%s5 + $0x20] sm:$0xff]
    %v372 = vld [vmem:[%s5 + $0x28] sm:$0xff]
    %v373 = vld [vmem:[%s5 + $0x30] sm:$0xff]
    %v374 = vld [vmem:[%s5 + $0x38] sm:$0xff]
    %v375 = vld [vmem:[%s5 + $0x40] sm:$0xff]
    %v376 = vld [vmem:[%s5 + $0x48] sm:$0xff]
    %v377 = vld [vmem:[%s5 + $0x50] sm:$0xff]
    %v378 = vld [vmem:[%s5 + $0x58] sm:$0xff]
    %v379 = vld [vmem:[%s5 + $0x60] sm:$0xff]
    %v380 = vld [vmem:[%s5 + $0x68] sm:$0xff]
    %v381 = vld [vmem:[%s5 + $0x70] sm:$0xff]
    %v382 = vld [vmem:[%s5 + $0x78] sm:$0xff]
    %v383 = vpack.c.bf16 %v352, %v351
    %v384 = vpack.c.bf16 %v354, %v353
    %v385 = vpack.c.bf16 %v356, %v355
    %v386 = vpack.c.bf16 %v358, %v357
    %v387 = vpack.c.bf16 %v360, %v359
    %v388 = vpack.c.bf16 %v362, %v361
    %v389 = vpack.c.bf16 %v364, %v363
    %v390 = vpack.c.bf16 %v366, %v365
    %v391 = vld [vmem:[#allocation2] sm:$0xf]
    %v392 = vld [vmem:[#allocation2 + $0x4] sm:$0xf]
    %v393 = vld [vmem:[#allocation2 + $0x8] sm:$0xf]
    %v394 = vld [vmem:[#allocation2 + $0xc] sm:$0xf]
    %v395 = vld [vmem:[#allocation2 + $0x10] sm:$0xf]
    %v396 = vld [vmem:[#allocation2 + $0x14] sm:$0xf]
    %v397 = vld [vmem:[#allocation2 + $0x18] sm:$0xf]
    %v398 = vld [vmem:[#allocation2 + $0x1c] sm:$0xf]
    %v399 = vld [vmem:[#allocation2 + $0x20] sm:$0xf]
    %v400 = vld [vmem:[#allocation2 + $0x24] sm:$0xf]
    %v401 = vld [vmem:[#allocation2 + $0x28] sm:$0xf]
    %v402 = vld [vmem:[#allocation2 + $0x2c] sm:$0xf]
    %v403 = vld [vmem:[#allocation2 + $0x30] sm:$0xf]
    %v404 = vld [vmem:[#allocation2 + $0x34] sm:$0xf]
    %v405 = vld [vmem:[#allocation2 + $0x38] sm:$0xf]
    %v406 = vld [vmem:[#allocation2 + $0x3c] sm:$0xf]
    %v423 = vunpack.c.l.b16 %v391
    %v424 = vunpack.c.l.b16 %v392
    %v425 = vunpack.c.l.b16 %v393
    %v426 = vunpack.c.l.b16 %v394
    %v427 = vunpack.c.l.b16 %v395
    %v428 = vunpack.c.l.b16 %v396
    %v429 = vunpack.c.l.b16 %v397
    %v430 = vunpack.c.l.b16 %v398
    %v431 = vunpack.c.l.b16 %v399
    %v432 = vunpack.c.l.b16 %v400
    %v433 = vunpack.c.l.b16 %v401
    %v434 = vunpack.c.l.b16 %v402
    %v435 = vunpack.c.l.b16 %v403
    %v436 = vunpack.c.l.b16 %v404
    %v437 = vunpack.c.l.b16 %v405
    %v438 = vunpack.c.l.b16 %v406
    %v439 = vpack.c.b16 %v424, %v423
    %v440 = vpack.c.b16 %v426, %v425
    %v441 = vpack.c.b16 %v428, %v427
    %v442 = vpack.c.b16 %v430, %v429
    %v443 = vpack.c.b16 %v432, %v431
    %v444 = vpack.c.b16 %v434, %v433
    %v445 = vpack.c.b16 %v436, %v435
    %v446 = vpack.c.b16 %v438, %v437
    %455 = vmatprep.subr.bf16.mxu0 0
    %456 = vmatpush1.bf16.msra.mxu0 %v439
    %457 = vmatprep.subr.bf16.mxu0 0
    %458 = vmatpush1.bf16.msra.mxu0 %v440
    %459 = vmatprep.subr.bf16.mxu0 0
    %460 = vmatpush1.bf16.msra.mxu0 %v441
    %461 = vmatprep.subr.bf16.mxu0 0
    %462 = vmatpush1.bf16.msra.mxu0 %v442
    %463 = vmatprep.subr.bf16.mxu0 0
    %464 = vmatpush1.bf16.msra.mxu0 %v443
    %465 = vmatprep.subr.bf16.mxu0 0
    %466 = vmatpush1.bf16.msra.mxu0 %v444
    %467 = vmatprep.subr.bf16.mxu0 0
    %468 = vmatpush1.bf16.msra.mxu0 %v445
    %469 = vmatprep.subr.bf16.mxu0 0
    %470 = vmatpush1.bf16.msra.mxu0 %v446
    %471 = vmatprep.subr.bf16.mxu0 0
    %472 = vmatpush1.bf16.msra.mxu0 0
    %473 = vmatprep.subr.bf16.mxu0 0
    %474 = vmatpush1.bf16.msra.mxu0 0
    %475 = vmatprep.subr.bf16.mxu0 0
    %476 = vmatpush1.bf16.msra.mxu0 0
    %477 = vmatprep.subr.bf16.mxu0 0
    %478 = vmatpush1.bf16.msra.mxu0 0
    %479 = vmatprep.subr.bf16.mxu0 0
    %480 = vmatpush1.bf16.msra.mxu0 0
    %481 = vmatprep.subr.bf16.mxu0 0
    %482 = vmatpush1.bf16.msra.mxu0 0
    %483 = vmatprep.subr.bf16.mxu0 0
    %484 = vmatpush1.bf16.msra.mxu0 0
    %485 = vmatprep.subr.bf16.mxu0 0
    %486 = vmatpush1.bf16.msra.mxu0 0
    %487 = vmatprep.mubr.bf16.mxu0 0
    %488 = vmatmul.mubr.bf16.gmra.mrb[0].mxu0 %v383
    %v489 = vpop.f32.mrb[0].mxu0
    %v490 = vadd.f32 0.0, %v489
    %v491 = vpop.f32.mrb[0].mxu0
    %v492 = vpop.f32.mrb[0].mxu0
    %v493 = vadd.f32 0.0, %v492
    %v494 = vpop.f32.mrb[0].mxu0
    %495 = vmatprep.mubr.bf16.mxu0 0
    %496 = vmatmul.mubr.bf16.gmra.mrb[0].mxu0 %v384
    %v497 = vpop.f32.mrb[0].mxu0
    %v498 = vadd.f32 0.0, %v497
    %v499 = vpop.f32.mrb[0].mxu0
    %v500 = vpop.f32.mrb[0].mxu0
    %v501 = vadd.f32 0.0, %v500
    %v502 = vpop.f32.mrb[0].mxu0
    %503 = vmatprep.mubr.bf16.mxu0 0
    %504 = vmatmul.mubr.bf16.gmra.mrb[0].mxu0 %v385
    %v505 = vpop.f32.mrb[0].mxu0
    %v506 = vadd.f32 0.0, %v505
    %v507 = vpop.f32.mrb[0].mxu0
    %v508 = vpop.f32.mrb[0].mxu0
    %v509 = vadd.f32 0.0, %v508
    %v510 = vpop.f32.mrb[0].mxu0
    %511 = vmatprep.mubr.bf16.mxu0 0
    %512 = vmatmul.mubr.bf16.gmra.mrb[0].mxu0 %v386
    %v513 = vpop.f32.mrb[0].mxu0
    %v514 = vadd.f32 0.0, %v513
    %v515 = vpop.f32.mrb[0].mxu0
    %v516 = vpop.f32.mrb[0].mxu0
    %v517 = vadd.f32 0.0, %v516
    %v518 = vpop.f32.mrb[0].mxu0
    %519 = vmatprep.mubr.bf16.mxu0 0
    %520 = vmatmul.mubr.bf16.gmra.mrb[0].mxu0 %v387
    %v521 = vpop.f32.mrb[0].mxu0
    %v522 = vadd.f32 0.0, %v521
    %v523 = vpop.f32.mrb[0].mxu0
    %v524 = vpop.f32.mrb[0].mxu0
    %v525 = vadd.f32 0.0, %v524
    %v526 = vpop.f32.mrb[0].mxu0
    %527 = vmatprep.mubr.bf16.mxu0 0
    %528 = vmatmul.mubr.bf16.gmra.mrb[0].mxu0 %v388
    %v529 = vpop.f32.mrb[0].mxu0
    %v530 = vadd.f32 0.0, %v529
    %v531 = vpop.f32.mrb[0].mxu0
    %v532 = vpop.f32.mrb[0].mxu0
    %v533 = vadd.f32 0.0, %v532
    %v534 = vpop.f32.mrb[0].mxu0
    %535 = vmatprep.mubr.bf16.mxu0 0
    %536 = vmatmul.mubr.bf16.gmra.mrb[0].mxu0 %v389
    %v537 = vpop.f32.mrb[0].mxu0
    %v538 = vadd.f32 0.0, %v537
    %v539 = vpop.f32.mrb[0].mxu0
    %v540 = vpop.f32.mrb[0].mxu0
    %v541 = vadd.f32 0.0, %v540
    %v542 = vpop.f32.mrb[0].mxu0
    %543 = vmatprep.mubr.bf16.mxu0 0
    %544 = vmatmul.mubr.bf16.gmra.mrb[0].mxu0 %v390
    %v545 = vpop.f32.mrb[0].mxu0
    %v546 = vadd.f32 0.0, %v545
    %v547 = vpop.f32.mrb[0].mxu0
    %v548 = vpop.f32.mrb[0].mxu0
    %v549 = vadd.f32 0.0, %v548
    %v550 = vpop.f32.mrb[0].mxu0
    %551 = vdwg.mxu0
    %v552 = vadd.f32 %v367, %v490
    %v553 = vadd.f32 %v368, %v493
    %v554 = vadd.f32 %v369, %v498
    %v555 = vadd.f32 %v370, %v501
    %v556 = vadd.f32 %v371, %v506
    %v557 = vadd.f32 %v372, %v509
    %v558 = vadd.f32 %v373, %v514
    %v559 = vadd.f32 %v374, %v517
    %v560 = vadd.f32 %v375, %v522
    %v561 = vadd.f32 %v376, %v525
    %v562 = vadd.f32 %v377, %v530
    %v563 = vadd.f32 %v378, %v533
    %v564 = vadd.f32 %v379, %v538
    %v565 = vadd.f32 %v380, %v541
    %v566 = vadd.f32 %v381, %v546
    %v567 = vadd.f32 %v382, %v549
    %568 = vst [vmem:[%s5] sm:$0xff] %v552
    %569 = vst [vmem:[%s5 + $0x8] sm:$0xff] %v553
    %570 = vst [vmem:[%s5 + $0x10] sm:$0xff] %v554
    %571 = vst [vmem:[%s5 + $0x18] sm:$0xff] %v555
    %572 = vst [vmem:[%s5 + $0x20] sm:$0xff] %v556
    %573 = vst [vmem:[%s5 + $0x28] sm:$0xff] %v557
    %574 = vst [vmem:[%s5 + $0x30] sm:$0xff] %v558
    %575 = vst [vmem:[%s5 + $0x38] sm:$0xff] %v559
    %576 = vst [vmem:[%s5 + $0x40] sm:$0xff] %v560
    %577 = vst [vmem:[%s5 + $0x48] sm:$0xff] %v561
    %578 = vst [vmem:[%s5 + $0x50] sm:$0xff] %v562
    %579 = vst [vmem:[%s5 + $0x58] sm:$0xff] %v563
    %580 = vst [vmem:[%s5 + $0x60] sm:$0xff] %v564
    %581 = vst [vmem:[%s5 + $0x68] sm:$0xff] %v565
    %582 = vst [vmem:[%s5 + $0x70] sm:$0xff] %v566
    %583 = vst [vmem:[%s5 + $0x78] sm:$0xff] %v567
    // Predicated region
    $region30: #{_mlp_forward_impl.1} parent=1 // pred_check
      %p584 = pneg %p35
    $region31: #{_mlp_forward_impl.1} parent=1 // pred_check_branch
      %586 = sbr.rel (%p584) target = $region33
    $region32: #{_mlp_forward_impl.1} parent=1 // pred_region
      %v587 = vld [vmem:[%s5] sm:$0xff]
      %v588 = vld [vmem:[%s5 + $0x8] sm:$0xff]
      %v589 = vld [vmem:[%s5 + $0x10] sm:$0xff]
      %v590 = vld [vmem:[%s5 + $0x18] sm:$0xff]
      %v591 = vld [vmem:[%s5 + $0x20] sm:$0xff]
      %v592 = vld [vmem:[%s5 + $0x28] sm:$0xff]
      %v593 = vld [vmem:[%s5 + $0x30] sm:$0xff]
      %v594 = vld [vmem:[%s5 + $0x38] sm:$0xff]
      %v595 = vld [vmem:[%s5 + $0x40] sm:$0xff]
      %v596 = vld [vmem:[%s5 + $0x48] sm:$0xff]
      %v597 = vld [vmem:[%s5 + $0x50] sm:$0xff]
      %v598 = vld [vmem:[%s5 + $0x58] sm:$0xff]
      %v599 = vld [vmem:[%s5 + $0x60] sm:$0xff]
      %v600 = vld [vmem:[%s5 + $0x68] sm:$0xff]
      %v601 = vld [vmem:[%s5 + $0x70] sm:$0xff]
      %v602 = vld [vmem:[%s5 + $0x78] sm:$0xff]
      %v603 = vld [vmem:[%s4] sm:$0x1]
      %v605 = vlaneseq
      %v606 = vshrl.u32 %v605, 7
      %v607 = vsub.s32 0, %v606
      %v608 = vrot.slane %v603, %v607
      %v610 = vadd.f32 %v587, %v608
      %v611 = vadd.f32 %v588, %v608
      %v612 = vadd.f32 %v589, %v608
      %v613 = vadd.f32 %v590, %v608
      %v614 = vadd.f32 %v591, %v608
      %v615 = vadd.f32 %v592, %v608
      %v616 = vadd.f32 %v593, %v608
      %v617 = vadd.f32 %v594, %v608
      %v618 = vadd.f32 %v595, %v608
      %v619 = vadd.f32 %v596, %v608
      %v620 = vadd.f32 %v597, %v608
      %v621 = vadd.f32 %v598, %v608
      %v622 = vadd.f32 %v599, %v608
      %v623 = vadd.f32 %v600, %v608
      %v624 = vadd.f32 %v601, %v608
      %v625 = vadd.f32 %v602, %v608
      %626 = vst [vmem:[%s5] sm:$0xff] %v610
      %627 = vst [vmem:[%s5 + $0x8] sm:$0xff] %v611
      %628 = vst [vmem:[%s5 + $0x10] sm:$0xff] %v612
      %629 = vst [vmem:[%s5 + $0x18] sm:$0xff] %v613
      %630 = vst [vmem:[%s5 + $0x20] sm:$0xff] %v614
      %631 = vst [vmem:[%s5 + $0x28] sm:$0xff] %v615
      %632 = vst [vmem:[%s5 + $0x30] sm:$0xff] %v616
      %633 = vst [vmem:[%s5 + $0x38] sm:$0xff] %v617
      %634 = vst [vmem:[%s5 + $0x40] sm:$0xff] %v618
      %635 = vst [vmem:[%s5 + $0x48] sm:$0xff] %v619
      %636 = vst [vmem:[%s5 + $0x50] sm:$0xff] %v620
      %637 = vst [vmem:[%s5 + $0x58] sm:$0xff] %v621
      %638 = vst [vmem:[%s5 + $0x60] sm:$0xff] %v622
      %639 = vst [vmem:[%s5 + $0x68] sm:$0xff] %v623
      %640 = vst [vmem:[%s5 + $0x70] sm:$0xff] %v624
      %641 = vst [vmem:[%s5 + $0x78] sm:$0xff] %v625
    $region33: #{_mlp_forward_impl.1} parent=1 // pred_fallthru
      _
    // Predicated region
    $region34: #{_mlp_forward_impl.1} parent=1 // pred_check
      _
    $region35: #{_mlp_forward_impl.1} parent=1 // pred_check_branch
      %643 = sbr.rel (0) target = $region37
    $region36: #{_mlp_forward_impl.1} parent=1 // pred_region
      _
    $region37: #{_mlp_forward_impl.1} parent=1 // pred_fallthru
      _
    // Predicated region
    $region38: #{_mlp_forward_impl.1} parent=1 // pred_check
      _
    $region39: #{_mlp_forward_impl.1} parent=1 // pred_check_branch
      %645 = sbr.rel (0) target = $region41
    $region40: #{_mlp_forward_impl.1} parent=1 // pred_region
      _
    $region41: #{_mlp_forward_impl.1} parent=1 // pred_fallthru
      _
    %646 = vsyncpa [#allocation3], 1

</llo_original>
